<compile_context>
chip_gen: v7x
topology: tpu7x:2x2x1
jax: 0.10.0
libtpu: 0.0.40
codegen_flags: <defaults>
</compile_context>

<pallas_src>
import jax
import jax.numpy as jnp
from jax.experimental import pallas as pl
from jax.experimental.pallas import tpu as pltpu

# ----------------------------- problem sizes (small, deterministic) -------------------
B = 8                               # batch
OBS_DIM = 48                        # obs_shape[0]
EF_DIM = 8                          # ef_encoder.env_factor_dim
EF_HID = 32                         # ef encoder hidden width
EF_Z = 16                           # ef_encoder.hidden_dim (latent fed to actor)
INNER = OBS_DIM - EF_DIM            # inner_state_size = 40
ACTOR_HID = (32, 32, 32)            # model_cfg['pi_hid_sizes']
CRITIC_HID = (32, 32, 32)           # model_cfg['vf_hid_sizes']
ACT_DIM = 12                        # actions_shape
INITIAL_STD = 1.0

LANE = 128
AH = ACTOR_HID[0]                   # 32
FUSED = ACTOR_HID[0] + CRITIC_HID[0]  # 64  (actor lanes 0:32 | critic lanes 32:64)
IN0 = OBS_DIM + EF_Z                # 64  fused layer-0 input width = [obs | z]

# ---- parameter-slab row layout (each weight block starts on a sublane multiple of 8) --
ROW_EW1 = 0          # 8 rows : ef-encoder layer-1 weight  (EF_DIM, EF_HID)
ROW_BIAS = 8         # 8 rows : all biases, one per row (see pack_params)
ROW_EW2 = 16         # 32 rows: ef-encoder layer-2 weight  (EF_HID, EF_Z)
ROW_W0 = 48          # 64 rows: fused actor+critic layer-0 weight (IN0, FUSED)
ROW_W1 = 112         # 64 rows: fused hidden layer 1 (block-diagonal)
ROW_W2 = 176         # 64 rows: fused hidden layer 2 (block-diagonal)
ROW_W3 = 240         # 64 rows: fused output layer (FUSED, 128): mean lanes 0:12, value lane 12
SLAB_ROWS = 304      # 304 * 128 * 4B ~= 152 KiB in VMEM

_SELU_SCALE = 1.0507009873554805
_SELU_ALPHA = 1.6732632423543772


def _selu(x):
    # SELU: scale * (x if x > 0 else alpha * (exp(x) - 1)); exp goes to the EUP slot.
    neg = _SELU_ALPHA * (jnp.exp(jnp.minimum(x, 0.0)) - 1.0)
    return _SELU_SCALE * jnp.where(x > 0.0, x, neg)


# ----------------------------------- Pallas kernel ------------------------------------
def _rma_fused_kernel(x_ref, p_ref, out_ref):
    """x_ref: (B,128) [obs | env_factor | 0], p_ref: (304,128) packed params,
    out_ref: (B,128) [actions_mean(12) | value(1) | 0]."""
    f32 = jnp.float32

    obs = x_ref[:, 0:OBS_DIM]                          # (B, 48)
    ef = x_ref[:, OBS_DIM:OBS_DIM + EF_DIM]            # (B, 8)

    # --- env-factor encoder: Linear -> SELU -> Linear --------------------------------
    ew1 = p_ref[ROW_EW1:ROW_EW1 + EF_DIM, 0:EF_HID]
    eb1 = p_ref[ROW_BIAS + 0:ROW_BIAS + 1, 0:EF_HID]
    ew2 = p_ref[ROW_EW2:ROW_EW2 + EF_HID, 0:EF_Z]
    eb2 = p_ref[ROW_BIAS + 1:ROW_BIAS + 2, 0:EF_Z]
    h = _selu(jnp.dot(ef, ew1, preferred_element_type=f32) + eb1)
    z = jnp.dot(h, ew2, preferred_element_type=f32) + eb2          # (B, EF_Z)

    # --- fused actor+critic layer 0: input [obs | z], one (IN0 x FUSED) matmul --------
    # actor uses obs rows 0:INNER and z rows OBS_DIM:IN0 (rows INNER:OBS_DIM are zeroed
    # in the packed weight); critic uses obs rows 0:OBS_DIM only.
    x0 = jnp.concatenate([obs, z], axis=-1)                        # (B, IN0)
    w0 = p_ref[ROW_W0:ROW_W0 + IN0, 0:FUSED]
    b0 = p_ref[ROW_BIAS + 2:ROW_BIAS + 3, 0:FUSED]
    a = _selu(jnp.dot(x0, w0, preferred_element_type=f32) + b0)    # (B, FUSED)

    # --- fused hidden layers 1..2: block-diagonal [aw | 0; 0 | cw] --------------------
    w1 = p_ref[ROW_W1:ROW_W1 + FUSED, 0:FUSED]
    b1 = p_ref[ROW_BIAS + 3:ROW_BIAS + 4, 0:FUSED]
    a = _selu(jnp.dot(a, w1, preferred_element_type=f32) + b1)

    w2 = p_ref[ROW_W2:ROW_W2 + FUSED, 0:FUSED]
    b2 = p_ref[ROW_BIAS + 4:ROW_BIAS + 5, 0:FUSED]
    a = _selu(jnp.dot(a, w2, preferred_element_type=f32) + b2)

    # --- fused output layer: lanes 0:12 = actions_mean, lane 12 = value, rest 0 -------
    w3 = p_ref[ROW_W3:ROW_W3 + FUSED, 0:LANE]
    b3 = p_ref[ROW_BIAS + 5:ROW_BIAS + 6, 0:LANE]
    out_ref[...] = jnp.dot(a, w3, preferred_element_type=f32) + b3


# ----------------------------------- wrapper ------------------------------------------
def pack_params(p):
    """Pack all parameters into one (SLAB_ROWS, 128) f32 slab (do this once, up front)."""
    slab = jnp.zeros((SLAB_ROWS, LANE), jnp.float32)

    def put(s, row, arr):
        r, c = arr.shape
        return s.at[row:row + r, 0:c].set(arr.astype(jnp.float32))

    # ef encoder
    slab = put(slab, ROW_EW1, p["ew1"])
    slab = put(slab, ROW_EW2, p["ew2"])
    slab = put(slab, ROW_BIAS + 0, p["eb1"])
    slab = put(slab, ROW_BIAS + 1, p["eb2"])

    # fused layer 0 weight (IN0, FUSED)
    w0 = jnp.zeros((IN0, FUSED), jnp.float32)
    w0 = w0.at[0:INNER, 0:AH].set(p["aw0i"])                   # obs[:, :INNER] -> actor
    w0 = w0.at[OBS_DIM:OBS_DIM + EF_Z, 0:AH].set(p["aw0h"])    # z -> actor
    w0 = w0.at[0:OBS_DIM, AH:FUSED].set(p["cw0"])              # obs -> critic
    slab = put(slab, ROW_W0, w0)
    slab = put(slab, ROW_BIAS + 2, jnp.concatenate([p["ab0"], p["cb0"]], axis=-1))

    # fused hidden layers (block diagonal)
    def blockdiag(aw, cw):
        w = jnp.zeros((FUSED, FUSED), jnp.float32)
        w = w.at[0:AH, 0:AH].set(aw)
        w = w.at[AH:FUSED, AH:FUSED].set(cw)
        return w

    slab = put(slab, ROW_W1, blockdiag(p["aw1"], p["cw1"]))
    slab = put(slab, ROW_BIAS + 3, jnp.concatenate([p["ab1"], p["cb1"]], axis=-1))
    slab = put(slab, ROW_W2, blockdiag(p["aw2"], p["cw2"]))
    slab = put(slab, ROW_BIAS + 4, jnp.concatenate([p["ab2"], p["cb2"]], axis=-1))

    # fused output layer (FUSED, 128): mean in lanes 0:ACT_DIM, value in lane ACT_DIM
    w3 = jnp.zeros((FUSED, LANE), jnp.float32)
    w3 = w3.at[0:AH, 0:ACT_DIM].set(p["aw3"])
    w3 = w3.at[AH:FUSED, ACT_DIM:ACT_DIM + 1].set(p["cw3"])
    slab = put(slab, ROW_W3, w3)
    b3 = jnp.zeros((1, LANE), jnp.float32)
    b3 = b3.at[:, 0:ACT_DIM].set(p["ab3"])
    b3 = b3.at[:, ACT_DIM:ACT_DIM + 1].set(p["cb3"])
    slab = put(slab, ROW_BIAS + 5, b3)
    return slab


@jax.jit
def rma_act_inference(obs, env_factor, param_slab, log_std):
    """Returns (actions_mean [B, ACT_DIM], value [B, 1], log_std [B, ACT_DIM])."""
    # single lane-dense input slab: [obs | env_factor | 0]
    x = jnp.zeros((B, LANE), jnp.float32)
    x = x.at[:, 0:OBS_DIM].set(obs)
    x = x.at[:, OBS_DIM:OBS_DIM + EF_DIM].set(env_factor)

    vmem = pl.BlockSpec(memory_space=pltpu.MemorySpace.VMEM)
    out = pl.pallas_call(
        _rma_fused_kernel,
        out_shape=jax.ShapeDtypeStruct((B, LANE), jnp.float32),
        in_specs=[vmem, vmem],
        out_specs=vmem,
    )(x, param_slab)

    mean = out[:, 0:ACT_DIM]
    value = out[:, ACT_DIM:ACT_DIM + 1]
    log_std_b = jnp.broadcast_to(log_std, (B, ACT_DIM))
    return mean, value, log_std_b


# ------------------------------ pure-JAX reference ------------------------------------
def rma_reference(obs, ef, p):
    h = _selu(ef @ p["ew1"] + p["eb1"])
    z = h @ p["ew2"] + p["eb2"]
    w0 = jnp.concatenate([p["aw0i"], p["aw0h"]], axis=0)
    a = _selu(jnp.concatenate([obs[:, :INNER], z], axis=-1) @ w0 + p["ab0"])
    a = _selu(a @ p["aw1"] + p["ab1"])
    a = _selu(a @ p["aw2"] + p["ab2"])
    mean = a @ p["aw3"] + p["ab3"]
    v = _selu(obs @ p["cw0"] + p["cb0"])
    v = _selu(v @ p["cw1"] + p["cb1"])
    v = _selu(v @ p["cw2"] + p["cb2"])
    value = v @ p["cw3"] + p["cb3"]
    return mean, value


# ----------------------------- deterministic parameter construction -------------------
def _orthogonal(key, n_in, n_out, gain):
    # Deterministic orthogonal init (mirrors torch.nn.init.orthogonal_), stored as (in, out).
    a = jax.random.normal(key, (max(n_in, n_out), min(n_in, n_out)), dtype=jnp.float32)
    q, r = jnp.linalg.qr(a)
    q = q * jnp.sign(jnp.diag(r))
    if n_in < n_out:
        q = q.T
    return (gain * q[:n_in, :n_out]).astype(jnp.float32)


def make_params(key):
    keys = jax.random.split(key, 16)
    sqrt2 = float(jnp.sqrt(2.0))
    p = {}
    # EF encoder (relu-ish gain, zero bias)
    p["ew1"] = _orthogonal(keys[0], EF_DIM, EF_HID, sqrt2)
    p["eb1"] = jnp.zeros((1, EF_HID), jnp.float32)
    p["ew2"] = _orthogonal(keys[1], EF_HID, EF_Z, sqrt2)
    p["eb2"] = jnp.zeros((1, EF_Z), jnp.float32)
    # Actor: gains [sqrt2, sqrt2, sqrt2, 0.01]
    w0 = _orthogonal(keys[2], INNER + EF_Z, ACTOR_HID[0], sqrt2)
    p["aw0i"], p["aw0h"] = w0[:INNER, :], w0[INNER:, :]
    p["ab0"] = jnp.zeros((1, ACTOR_HID[0]), jnp.float32)
    p["aw1"] = _orthogonal(keys[3], ACTOR_HID[0], ACTOR_HID[1], sqrt2)
    p["ab1"] = jnp.zeros((1, ACTOR_HID[1]), jnp.float32)
    p["aw2"] = _orthogonal(keys[4], ACTOR_HID[1], ACTOR_HID[2], sqrt2)
    p["ab2"] = jnp.zeros((1, ACTOR_HID[2]), jnp.float32)
    p["aw3"] = _orthogonal(keys[5], ACTOR_HID[2], ACT_DIM, 0.01)
    p["ab3"] = jnp.zeros((1, ACT_DIM), jnp.float32)
    # Critic: gains [sqrt2, sqrt2, sqrt2, 1.0]
    p["cw0"] = _orthogonal(keys[6], OBS_DIM, CRITIC_HID[0], sqrt2)
    p["cb0"] = jnp.zeros((1, CRITIC_HID[0]), jnp.float32)
    p["cw1"] = _orthogonal(keys[7], CRITIC_HID[0], CRITIC_HID[1], sqrt2)
    p["cb1"] = jnp.zeros((1, CRITIC_HID[1]), jnp.float32)
    p["cw2"] = _orthogonal(keys[8], CRITIC_HID[1], CRITIC_HID[2], sqrt2)
    p["cb2"] = jnp.zeros((1, CRITIC_HID[2]), jnp.float32)
    p["cw3"] = _orthogonal(keys[9], CRITIC_HID[2], 1, 1.0)
    p["cb3"] = jnp.zeros((1, 1), jnp.float32)
    # log_std = log(initial_std) * ones(actions_shape)
    p["log_std"] = jnp.full((ACT_DIM,), jnp.log(INITIAL_STD), jnp.float32)
    return p


if __name__ == "__main__":
    key = jax.random.PRNGKey(0)
    k_obs, k_ef, k_par = jax.random.split(key, 3)
    obs = jax.random.normal(k_obs, (B, OBS_DIM), dtype=jnp.float32)
    env_factor = jax.random.normal(k_ef, (B, EF_DIM), dtype=jnp.float32)
    params = make_params(k_par)

    # Pack parameters once (one VMEM slab -> one parameter DMA per kernel call).
    param_slab = pack_params(params)

    mean, value, log_std = rma_act_inference(obs, env_factor, param_slab, params["log_std"])
    jax.block_until_ready((mean, value, log_std))

    assert mean.shape == (B, ACT_DIM) and value.shape == (B, 1) and log_std.shape == (B, ACT_DIM)
    assert bool(jnp.all(jnp.isfinite(mean))) and bool(jnp.all(jnp.isfinite(value)))

    # Numerical check against a pure-JAX reference of the unfused network.
    ref_mean, ref_value = rma_reference(obs, env_factor, params)
    assert bool(jnp.allclose(mean, ref_mean, atol=5e-3, rtol=5e-3))
    assert bool(jnp.allclose(value, ref_value, atol=5e-3, rtol=5e-3))

    print("KERNEL_OK")
</pallas_src>

<mosaic_0001>
module attributes {stable_mosaic.version = 11 : i64} {
  func.func @_rma_fused_kernel(%arg0: memref<8x128xf32, #tpu.memory_space<vmem>>, %arg1: memref<304x128xf32, #tpu.memory_space<vmem>>, %arg2: memref<8x128xf32, #tpu.memory_space<vmem>>) attributes {dimension_semantics = [], scalar_prefetch = 0 : i64, scratch_operands = 0 : i64, tpu.core_type = #tpu.core_type<tc>} {
    %c0 = arith.constant 0 : index
    %c0_0 = arith.constant 0 : index
    %0 = vector.load %arg0[%c0, %c0_0] : memref<8x128xf32, #tpu.memory_space<vmem>>, vector<8x48xf32>
    %c0_1 = arith.constant 0 : index
    %c48 = arith.constant 48 : index
    %1 = vector.load %arg0[%c0_1, %c48] : memref<8x128xf32, #tpu.memory_space<vmem>>, vector<8x8xf32>
    %c0_2 = arith.constant 0 : index
    %c0_3 = arith.constant 0 : index
    %2 = vector.load %arg1[%c0_2, %c0_3] : memref<304x128xf32, #tpu.memory_space<vmem>>, vector<8x32xf32>
    %c8 = arith.constant 8 : index
    %c0_4 = arith.constant 0 : index
    %3 = vector.load %arg1[%c8, %c0_4] : memref<304x128xf32, #tpu.memory_space<vmem>>, vector<1x32xf32>
    %c16 = arith.constant 16 : index
    %c0_5 = arith.constant 0 : index
    %4 = vector.load %arg1[%c16, %c0_5] : memref<304x128xf32, #tpu.memory_space<vmem>>, vector<32x16xf32>
    %c9 = arith.constant 9 : index
    %c0_6 = arith.constant 0 : index
    %5 = vector.load %arg1[%c9, %c0_6] : memref<304x128xf32, #tpu.memory_space<vmem>>, vector<1x16xf32>
    %cst = arith.constant dense<0.000000e+00> : vector<8x32xf32>
    %6 = tpu.matmul %1, %2, %cst {dimension_numbers = #tpu.dot_dimension_numbers<[1], [0], [0], [1], [0, 0, 1, 1], [], []>} : vector<8x8xf32>, vector<8x32xf32>, vector<8x32xf32> -> vector<8x32xf32>
    %7 = vector.broadcast %3 : vector<1x32xf32> to vector<8x32xf32>
    %8 = arith.addf %6, %7 : vector<8x32xf32>
    %cst_7 = arith.constant 0.000000e+00 : f32
    %9 = vector.broadcast %cst_7 : f32 to vector<8x32xf32>
    %10 = arith.minimumf %8, %9 : vector<8x32xf32>
    %11 = math.exp %10 : vector<8x32xf32>
    %cst_8 = arith.constant 1.000000e+00 : f32
    %12 = vector.broadcast %cst_8 : f32 to vector<8x32xf32>
    %13 = arith.subf %11, %12 : vector<8x32xf32>
    %cst_9 = arith.constant 1.67326319 : f32
    %14 = vector.broadcast %cst_9 : f32 to vector<8x32xf32>
    %15 = arith.mulf %14, %13 : vector<8x32xf32>
    %cst_10 = arith.constant 0.000000e+00 : f32
    %16 = vector.broadcast %cst_10 : f32 to vector<8x32xf32>
    %17 = arith.cmpf ogt, %8, %16 : vector<8x32xf32>
    %18 = arith.select %17, %8, %15 : vector<8x32xi1>, vector<8x32xf32>
    %cst_11 = arith.constant 1.05070102 : f32
    %19 = vector.broadcast %cst_11 : f32 to vector<8x32xf32>
    %20 = arith.mulf %19, %18 : vector<8x32xf32>
    %cst_12 = arith.constant dense<0.000000e+00> : vector<8x16xf32>
    %21 = tpu.matmul %20, %4, %cst_12 {dimension_numbers = #tpu.dot_dimension_numbers<[1], [0], [0], [1], [0, 0, 1, 1], [], []>} : vector<8x32xf32>, vector<32x16xf32>, vector<8x16xf32> -> vector<8x16xf32>
    %22 = vector.broadcast %5 : vector<1x16xf32> to vector<8x16xf32>
    %23 = arith.addf %21, %22 : vector<8x16xf32>
    %24 = tpu.concatenate %0, %23 in 1 : vector<8x48xf32>, vector<8x16xf32> -> vector<8x64xf32>
    %c48_13 = arith.constant 48 : index
    %c0_14 = arith.constant 0 : index
    %25 = vector.load %arg1[%c48_13, %c0_14] : memref<304x128xf32, #tpu.memory_space<vmem>>, vector<64x64xf32>
    %c10 = arith.constant 10 : index
    %c0_15 = arith.constant 0 : index
    %26 = vector.load %arg1[%c10, %c0_15] : memref<304x128xf32, #tpu.memory_space<vmem>>, vector<1x64xf32>
    %cst_16 = arith.constant dense<0.000000e+00> : vector<8x64xf32>
    %27 = tpu.matmul %24, %25, %cst_16 {dimension_numbers = #tpu.dot_dimension_numbers<[1], [0], [0], [1], [0, 0, 1, 1], [], []>} : vector<8x64xf32>, vector<64x64xf32>, vector<8x64xf32> -> vector<8x64xf32>
    %28 = vector.broadcast %26 : vector<1x64xf32> to vector<8x64xf32>
    %29 = arith.addf %27, %28 : vector<8x64xf32>
    %cst_17 = arith.constant 0.000000e+00 : f32
    %30 = vector.broadcast %cst_17 : f32 to vector<8x64xf32>
    %31 = arith.minimumf %29, %30 : vector<8x64xf32>
    %32 = math.exp %31 : vector<8x64xf32>
    %cst_18 = arith.constant 1.000000e+00 : f32
    %33 = vector.broadcast %cst_18 : f32 to vector<8x64xf32>
    %34 = arith.subf %32, %33 : vector<8x64xf32>
    %cst_19 = arith.constant 1.67326319 : f32
    %35 = vector.broadcast %cst_19 : f32 to vector<8x64xf32>
    %36 = arith.mulf %35, %34 : vector<8x64xf32>
    %cst_20 = arith.constant 0.000000e+00 : f32
    %37 = vector.broadcast %cst_20 : f32 to vector<8x64xf32>
    %38 = arith.cmpf ogt, %29, %37 : vector<8x64xf32>
    %39 = arith.select %38, %29, %36 : vector<8x64xi1>, vector<8x64xf32>
    %cst_21 = arith.constant 1.05070102 : f32
    %40 = vector.broadcast %cst_21 : f32 to vector<8x64xf32>
    %41 = arith.mulf %40, %39 : vector<8x64xf32>
    %c112 = arith.constant 112 : index
    %c0_22 = arith.constant 0 : index
    %42 = vector.load %arg1[%c112, %c0_22] : memref<304x128xf32, #tpu.memory_space<vmem>>, vector<64x64xf32>
    %c11 = arith.constant 11 : index
    %c0_23 = arith.constant 0 : index
    %43 = vector.load %arg1[%c11, %c0_23] : memref<304x128xf32, #tpu.memory_space<vmem>>, vector<1x64xf32>
    %cst_24 = arith.constant dense<0.000000e+00> : vector<8x64xf32>
    %44 = tpu.matmul %41, %42, %cst_24 {dimension_numbers = #tpu.dot_dimension_numbers<[1], [0], [0], [1], [0, 0, 1, 1], [], []>} : vector<8x64xf32>, vector<64x64xf32>, vector<8x64xf32> -> vector<8x64xf32>
    %45 = vector.broadcast %43 : vector<1x64xf32> to vector<8x64xf32>
    %46 = arith.addf %44, %45 : vector<8x64xf32>
    %cst_25 = arith.constant 0.000000e+00 : f32
    %47 = vector.broadcast %cst_25 : f32 to vector<8x64xf32>
    %48 = arith.minimumf %46, %47 : vector<8x64xf32>
    %49 = math.exp %48 : vector<8x64xf32>
    %cst_26 = arith.constant 1.000000e+00 : f32
    %50 = vector.broadcast %cst_26 : f32 to vector<8x64xf32>
    %51 = arith.subf %49, %50 : vector<8x64xf32>
    %cst_27 = arith.constant 1.67326319 : f32
    %52 = vector.broadcast %cst_27 : f32 to vector<8x64xf32>
    %53 = arith.mulf %52, %51 : vector<8x64xf32>
    %cst_28 = arith.constant 0.000000e+00 : f32
    %54 = vector.broadcast %cst_28 : f32 to vector<8x64xf32>
    %55 = arith.cmpf ogt, %46, %54 : vector<8x64xf32>
    %56 = arith.select %55, %46, %53 : vector<8x64xi1>, vector<8x64xf32>
    %cst_29 = arith.constant 1.05070102 : f32
    %57 = vector.broadcast %cst_29 : f32 to vector<8x64xf32>
    %58 = arith.mulf %57, %56 : vector<8x64xf32>
    %c176 = arith.constant 176 : index
    %c0_30 = arith.constant 0 : index
    %59 = vector.load %arg1[%c176, %c0_30] : memref<304x128xf32, #tpu.memory_space<vmem>>, vector<64x64xf32>
    %c12 = arith.constant 12 : index
    %c0_31 = arith.constant 0 : index
    %60 = vector.load %arg1[%c12, %c0_31] : memref<304x128xf32, #tpu.memory_space<vmem>>, vector<1x64xf32>
    %cst_32 = arith.constant dense<0.000000e+00> : vector<8x64xf32>
    %61 = tpu.matmul %58, %59, %cst_32 {dimension_numbers = #tpu.dot_dimension_numbers<[1], [0], [0], [1], [0, 0, 1, 1], [], []>} : vector<8x64xf32>, vector<64x64xf32>, vector<8x64xf32> -> vector<8x64xf32>
    %62 = vector.broadcast %60 : vector<1x64xf32> to vector<8x64xf32>
    %63 = arith.addf %61, %62 : vector<8x64xf32>
    %cst_33 = arith.constant 0.000000e+00 : f32
    %64 = vector.broadcast %cst_33 : f32 to vector<8x64xf32>
    %65 = arith.minimumf %63, %64 : vector<8x64xf32>
    %66 = math.exp %65 : vector<8x64xf32>
    %cst_34 = arith.constant 1.000000e+00 : f32
    %67 = vector.broadcast %cst_34 : f32 to vector<8x64xf32>
    %68 = arith.subf %66, %67 : vector<8x64xf32>
    %cst_35 = arith.constant 1.67326319 : f32
    %69 = vector.broadcast %cst_35 : f32 to vector<8x64xf32>
    %70 = arith.mulf %69, %68 : vector<8x64xf32>
    %cst_36 = arith.constant 0.000000e+00 : f32
    %71 = vector.broadcast %cst_36 : f32 to vector<8x64xf32>
    %72 = arith.cmpf ogt, %63, %71 : vector<8x64xf32>
    %73 = arith.select %72, %63, %70 : vector<8x64xi1>, vector<8x64xf32>
    %cst_37 = arith.constant 1.05070102 : f32
    %74 = vector.broadcast %cst_37 : f32 to vector<8x64xf32>
    %75 = arith.mulf %74, %73 : vector<8x64xf32>
    %c240 = arith.constant 240 : index
    %c0_38 = arith.constant 0 : index
    %76 = vector.load %arg1[%c240, %c0_38] : memref<304x128xf32, #tpu.memory_space<vmem>>, vector<64x128xf32>
    %c13 = arith.constant 13 : index
    %c0_39 = arith.constant 0 : index
    %77 = vector.load %arg1[%c13, %c0_39] : memref<304x128xf32, #tpu.memory_space<vmem>>, vector<1x128xf32>
    %cst_40 = arith.constant dense<0.000000e+00> : vector<8x128xf32>
    %78 = tpu.matmul %75, %76, %cst_40 {dimension_numbers = #tpu.dot_dimension_numbers<[1], [0], [0], [1], [0, 0, 1, 1], [], []>} : vector<8x64xf32>, vector<64x128xf32>, vector<8x128xf32> -> vector<8x128xf32>
    %79 = vector.broadcast %77 : vector<1x128xf32> to vector<8x128xf32>
    %80 = arith.addf %78, %79 : vector<8x128xf32>
    %c0_41 = arith.constant 0 : index
    %c0_42 = arith.constant 0 : index
    %81 = vector.load %arg2[%c0_41, %c0_42] : memref<8x128xf32, #tpu.memory_space<vmem>>, vector<8x128xf32>
    tpu.vector_store %arg2[%c0_41, %c0_42], %80 {strides = array<i32>} : memref<8x128xf32, #tpu.memory_space<vmem>>, vector<8x128xf32>,
    return
  }
}

</mosaic_0001>

<llo_original>
// kernel: rma_act_inference.1
$region0: #{rma_act_inference.1}
  #allocation0 [shape = 'u32[]', space=smem, size = 0x4, offset = 0x4, fixed_abs, tag = 'smem constant byte address 0x4 - core index']
  #allocation1 [shape = 'u32[144,128]{1,0:T(1,128)}', space=vmem, size = 0x12000, scoped, tag = 'internal scratch']
  %s0 = inlined_call_operand.vmem [shape: f32[8,128], index: 0, kind: input, shape index: {}]
  %s1 = inlined_call_operand.hbm [shape: f32[304,128], index: 1, kind: input, shape index: {}]
  %s2 = inlined_call_operand.vmem [shape: f32[8,128], index: 2, kind: output, shape index: {}]
  %s3 = sld [smem:[#allocation0]]
  $region22: #{rma_act_inference.1} parent=0
    _
  %s5 = ssub.s32 1, %s3
  %s6 = scalar_select 0, %s5, %s3
  $region1: #{rma_act_inference.1} parent=0
    #allocation2 [shape = 'u8[155648]{0}', space=vmem, size = 0x26000, scoped, tag = 'input window, operand 1, single buffered']
    #allocation3 [shape = 's32[1]{0}', space=sflag, size = 0x4, scoped, tag = 'scoped memory for rma_act_inference.1']
    %7 = vsyncpa [#allocation3], 0
    // Predicated region
    $region2: #{rma_act_inference.1} parent=1 // pred_check
      _
    $region3: #{rma_act_inference.1} parent=1 // pred_check_branch
      %9 = sbr.rel (0) target = $region5
    $region4: #{rma_act_inference.1} parent=1 // pred_region
      _
    $region5: #{rma_act_inference.1} parent=1 // pred_fallthru
      _
    // Predicated region
    $region6: #{rma_act_inference.1} parent=1 // pred_check
      _
    $region7: #{rma_act_inference.1} parent=1 // pred_check_branch
      %11 = sbr.rel (0) target = $region9
    $region8: #{rma_act_inference.1} parent=1 // pred_region
      %s13 = ssub.s32 4864, 4864
      %14 = vsyncadd [#allocation3], %s13
      %s15 = sshll.u32 [#allocation2], 4
      %s16 = int_to_ptr.vmem [resolvable:$true] %s15
      %21 = dma.hbm_to_vmem [thread:$0]  %s1, 4864, %s16, [#allocation3], 128, 128, 8
    $region9: #{rma_act_inference.1} parent=1 // pred_fallthru
      _
    // Predicated region
    $region10: #{rma_act_inference.1} parent=1 // pred_check
      _
    $region11: #{rma_act_inference.1} parent=1 // pred_check_branch
      %23 = sbr.rel (0) target = $region13
    $region12: #{rma_act_inference.1} parent=1 // pred_region
      %24 = dma.done [#allocation3], 4864
    $region13: #{rma_act_inference.1} parent=1 // pred_fallthru
      _
    %v25 = vld [vmem:[%s0] sm:$0xff]
    %v26 = vld [vmem:[#allocation2] sm:$0xff]
    %v27 = vld [vmem:[#allocation2 + $0x8] sm:$0x1]
    %v28 = vld [vmem:[#allocation2 + $0x10] sm:$0xff]
    %v29 = vld [vmem:[#allocation2 + $0x18] sm:$0xff]
    %v30 = vld [vmem:[#allocation2 + $0x20] sm:$0xff]
    %v31 = vld [vmem:[#allocation2 + $0x28] sm:$0xff]
    %v32 = vld [vmem:[#allocation2 + $0x9] sm:$0x1]
    %v33 = vlaneseq
    %v34 = vshrl.u32 %v33, 7
    %v35 = vsub.s32 0, %v34
    %v36 = vrot.slane %v27, %v35
    %38 = vrot.lane.b32.xlu0 %v25, 80
    %v39 = vpop.permute.xlu0 %38
    %vm40 = vcmask 64512
    %v41 = vsel %vm40, %v39, 0
    %43 = vmatprep.subr.mxu0 0.0
    %44 = vmatpush1.msra.mxu0 %v26
    %45 = vmatprep.subr.mxu0 0.0
    %46 = vmatpush1.msra.mxu0 0.0
    %47 = vmatprep.subr.mxu0 0.0
    %48 = vmatpush1.msra.mxu0 0.0
    %49 = vmatprep.subr.mxu0 0.0
    %50 = vmatpush1.msra.mxu0 0.0
    %51 = vmatprep.subr.mxu0 0.0
    %52 = vmatpush1.msra.mxu0 0.0
    %53 = vmatprep.subr.mxu0 0.0
    %54 = vmatpush1.msra.mxu0 0.0
    %55 = vmatprep.subr.mxu0 0.0
    %56 = vmatpush1.msra.mxu0 0.0
    %57 = vmatprep.subr.mxu0 0.0
    %58 = vmatpush1.msra.mxu0 0.0
    %59 = vmatprep.subr.mxu0 0.0
    %60 = vmatpush1.msra.mxu0 0.0
    %61 = vmatprep.subr.mxu0 0.0
    %62 = vmatpush1.msra.mxu0 0.0
    %63 = vmatprep.subr.mxu0 0.0
    %64 = vmatpush1.msra.mxu0 0.0
    %65 = vmatprep.subr.mxu0 0.0
    %66 = vmatpush1.msra.mxu0 0.0
    %67 = vmatprep.subr.mxu0 0.0
    %68 = vmatpush1.msra.mxu0 0.0
    %69 = vmatprep.subr.mxu0 0.0
    %70 = vmatpush1.msra.mxu0 0.0
    %71 = vmatprep.subr.mxu0 0.0
    %72 = vmatpush1.msra.mxu0 0.0
    %73 = vmatprep.subr.mxu0 0.0
    %74 = vmatpush1.msra.mxu0 0.0
    %75 = vmatprep.subr.mxu0 0.0
    %76 = vmatpush1.msra.mxu0 0.0
    %77 = vmatprep.subr.mxu0 0.0
    %78 = vmatpush1.msra.mxu0 0.0
    %79 = vmatprep.subr.mxu0 0.0
    %80 = vmatpush1.msra.mxu0 0.0
    %81 = vmatprep.subr.mxu0 0.0
    %82 = vmatpush1.msra.mxu0 0.0
    %83 = vmatprep.subr.mxu0 0.0
    %84 = vmatpush1.msra.mxu0 0.0
    %85 = vmatprep.subr.mxu0 0.0
    %86 = vmatpush1.msra.mxu0 0.0
    %87 = vmatprep.subr.mxu0 0.0
    %88 = vmatpush1.msra.mxu0 0.0
    %89 = vmatprep.subr.mxu0 0.0
    %90 = vmatpush1.msra.mxu0 0.0
    %91 = vmatprep.subr.mxu0 0.0
    %92 = vmatpush1.msra.mxu0 0.0
    %93 = vmatprep.subr.mxu0 0.0
    %94 = vmatpush1.msra.mxu0 0.0
    %95 = vmatprep.subr.mxu0 0.0
    %96 = vmatpush1.msra.mxu0 0.0
    %97 = vmatprep.subr.mxu0 0.0
    %98 = vmatpush1.msra.mxu0 0.0
    %99 = vmatprep.subr.mxu0 0.0
    %100 = vmatpush1.msra.mxu0 0.0
    %101 = vmatprep.subr.mxu0 0.0
    %102 = vmatpush1.msra.mxu0 0.0
    %103 = vmatprep.subr.mxu0 0.0
    %104 = vmatpush1.msra.mxu0 0.0
    %105 = vmatprep.subr.mxu0 0.0
    %106 = vmatpush1.msra.mxu0 0.0
    %107 = vmatprep.mubr.f32.mxu0 0.0
    %108 = vmatmul.mubr.f32.gmra.mrb[0].mxu0 %v41
    %v109 = vpop.f32.mrb[0].mxu0
    %v110 = vadd.f32 %v36, %v109
    %v111 = vpop.f32.mrb[0].mxu0
    %112 = vdwg.mxu0
    %v113 = vmin.f32 %v110, 0.0
    %v114 = vmul.f32 %v113, 1.442695
    %v115 = vpow.pop %v114
    %v116 = vsub.f32 %v115, 1.0
    %v117 = vmul.f32 %v116, 1.6732632
    %vm118 = vcmp.gt.f32.partialorder %v110, 0.0
    %v119 = vsel %vm118, %v110, %v117
    %v120 = vmul.f32 %v119, 1.050701
    %v121 = vlaneseq
    %v122 = vshrl.u32 %v121, 7
    %v123 = vsub.s32 0, %v122
    %v124 = vrot.slane %v32, %v123
    %vm125 = vcmask 261120
    %v127 = vsel %vm125, %v120, 0
    %129 = vmatprep.subr.mxu0 0.0
    %130 = vmatpush1.msra.mxu0 %v28
    %131 = vmatprep.subr.mxu0 0.0
    %132 = vmatpush1.msra.mxu0 %v29
    %133 = vmatprep.subr.mxu0 0.0
    %134 = vmatpush1.msra.mxu0 %v30
    %135 = vmatprep.subr.mxu0 0.0
    %136 = vmatpush1.msra.mxu0 %v31
    %137 = vmatprep.subr.mxu0 0.0
    %138 = vmatpush1.msra.mxu0 0.0
    %139 = vmatprep.subr.mxu0 0.0
    %140 = vmatpush1.msra.mxu0 0.0
    %141 = vmatprep.subr.mxu0 0.0
    %142 = vmatpush1.msra.mxu0 0.0
    %143 = vmatprep.subr.mxu0 0.0
    %144 = vmatpush1.msra.mxu0 0.0
    %145 = vmatprep.subr.mxu0 0.0
    %146 = vmatpush1.msra.mxu0 0.0
    %147 = vmatprep.subr.mxu0 0.0
    %148 = vmatpush1.msra.mxu0 0.0
    %149 = vmatprep.subr.mxu0 0.0
    %150 = vmatpush1.msra.mxu0 0.0
    %151 = vmatprep.subr.mxu0 0.0
    %152 = vmatpush1.msra.mxu0 0.0
    %153 = vmatprep.subr.mxu0 0.0
    %154 = vmatpush1.msra.mxu0 0.0
    %155 = vmatprep.subr.mxu0 0.0
    %156 = vmatpush1.msra.mxu0 0.0
    %157 = vmatprep.subr.mxu0 0.0
    %158 = vmatpush1.msra.mxu0 0.0
    %159 = vmatprep.subr.mxu0 0.0
    %160 = vmatpush1.msra.mxu0 0.0
    %161 = vmatprep.subr.mxu0 0.0
    %162 = vmatpush1.msra.mxu0 0.0
    %163 = vmatprep.subr.mxu0 0.0
    %164 = vmatpush1.msra.mxu0 0.0
    %165 = vmatprep.subr.mxu0 0.0
    %166 = vmatpush1.msra.mxu0 0.0
    %167 = vmatprep.subr.mxu0 0.0
    %168 = vmatpush1.msra.mxu0 0.0
    %169 = vmatprep.subr.mxu0 0.0
    %170 = vmatpush1.msra.mxu0 0.0
    %171 = vmatprep.subr.mxu0 0.0
    %172 = vmatpush1.msra.mxu0 0.0
    %173 = vmatprep.subr.mxu0 0.0
    %174 = vmatpush1.msra.mxu0 0.0
    %175 = vmatprep.subr.mxu0 0.0
    %176 = vmatpush1.msra.mxu0 0.0
    %177 = vmatprep.subr.mxu0 0.0
    %178 = vmatpush1.msra.mxu0 0.0
    %179 = vmatprep.subr.mxu0 0.0
    %180 = vmatpush1.msra.mxu0 0.0
    %181 = vmatprep.subr.mxu0 0.0
    %182 = vmatpush1.msra.mxu0 0.0
    %183 = vmatprep.subr.mxu0 0.0
    %184 = vmatpush1.msra.mxu0 0.0
    %185 = vmatprep.subr.mxu0 0.0
    %186 = vmatpush1.msra.mxu0 0.0
    %187 = vmatprep.subr.mxu0 0.0
    %188 = vmatpush1.msra.mxu0 0.0
    %189 = vmatprep.subr.mxu0 0.0
    %190 = vmatpush1.msra.mxu0 0.0
    %191 = vmatprep.subr.mxu0 0.0
    %192 = vmatpush1.msra.mxu0 0.0
    %193 = vmatprep.mubr.f32.mxu0 0.0
    %194 = vmatmul.mubr.f32.gmra.mrb[0].mxu0 %v127
    %v195 = vpop.f32.mrb[0].mxu0
    %v196 = vadd.f32 %v124, %v195
    %v197 = vpop.f32.mrb[0].mxu0
    %198 = vdwg.mxu0
    %200 = vrot.lane.b32.xlu0 %v196, 48
    %v201 = vpop.permute.xlu0 %200
    %vm203 = vcmask 392192
    %v204 = vsel %vm203, %v25, %v201
    %v205 = vld [vmem:[#allocation2 + $0x30] sm:$0xff]
    %v206 = vld [vmem:[#allocation2 + $0x38] sm:$0xff]
    %v207 = vld [vmem:[#allocation2 + $0x40] sm:$0xff]
    %v208 = vld [vmem:[#allocation2 + $0x48] sm:$0xff]
    %v209 = vld [vmem:[#allocation2 + $0x50] sm:$0xff]
    %v210 = vld [vmem:[#allocation2 + $0x58] sm:$0xff]
    %v211 = vld [vmem:[#allocation2 + $0x60] sm:$0xff]
    %v212 = vld [vmem:[#allocation2 + $0x68] sm:$0xff]
    %v213 = vld [vmem:[#allocation2 + $0xa] sm:$0x1]
    %v214 = vlaneseq
    %v215 = vshrl.u32 %v214, 7
    %v216 = vsub.s32 0, %v215
    %v217 = vrot.slane %v213, %v216
    %vm218 = vcmask 523264
    %v220 = vsel %vm218, %v204, 0
    %222 = vmatprep.subr.mxu0 0.0
    %223 = vmatpush1.msra.mxu0 %v205
    %224 = vmatprep.subr.mxu0 0.0
    %225 = vmatpush1.msra.mxu0 %v206
    %226 = vmatprep.subr.mxu0 0.0
    %227 = vmatpush1.msra.mxu0 %v207
    %228 = vmatprep.subr.mxu0 0.0
    %229 = vmatpush1.msra.mxu0 %v208
    %230 = vmatprep.subr.mxu0 0.0
    %231 = vmatpush1.msra.mxu0 %v209
    %232 = vmatprep.subr.mxu0 0.0
    %233 = vmatpush1.msra.mxu0 %v210
    %234 = vmatprep.subr.mxu0 0.0
    %235 = vmatpush1.msra.mxu0 %v211
    %236 = vmatprep.subr.mxu0 0.0
    %237 = vmatpush1.msra.mxu0 %v212
    %238 = vmatprep.subr.mxu0 0.0
    %239 = vmatpush1.msra.mxu0 0.0
    %240 = vmatprep.subr.mxu0 0.0
    %241 = vmatpush1.msra.mxu0 0.0
    %242 = vmatprep.subr.mxu0 0.0
    %243 = vmatpush1.msra.mxu0 0.0
    %244 = vmatprep.subr.mxu0 0.0
    %245 = vmatpush1.msra.mxu0 0.0
    %246 = vmatprep.subr.mxu0 0.0
    %247 = vmatpush1.msra.mxu0 0.0
    %248 = vmatprep.subr.mxu0 0.0
    %249 = vmatpush1.msra.mxu0 0.0
    %250 = vmatprep.subr.mxu0 0.0
    %251 = vmatpush1.msra.mxu0 0.0
    %252 = vmatprep.subr.mxu0 0.0
    %253 = vmatpush1.msra.mxu0 0.0
    %254 = vmatprep.subr.mxu0 0.0
    %255 = vmatpush1.msra.mxu0 0.0
    %256 = vmatprep.subr.mxu0 0.0
    %257 = vmatpush1.msra.mxu0 0.0
    %258 = vmatprep.subr.mxu0 0.0
    %259 = vmatpush1.msra.mxu0 0.0
    %260 = vmatprep.subr.mxu0 0.0
    %261 = vmatpush1.msra.mxu0 0.0
    %262 = vmatprep.subr.mxu0 0.0
    %263 = vmatpush1.msra.mxu0 0.0
    %264 = vmatprep.subr.mxu0 0.0
    %265 = vmatpush1.msra.mxu0 0.0
    %266 = vmatprep.subr.mxu0 0.0
    %267 = vmatpush1.msra.mxu0 0.0
    %268 = vmatprep.subr.mxu0 0.0
    %269 = vmatpush1.msra.mxu0 0.0
    %270 = vmatprep.subr.mxu0 0.0
    %271 = vmatpush1.msra.mxu0 0.0
    %272 = vmatprep.subr.mxu0 0.0
    %273 = vmatpush1.msra.mxu0 0.0
    %274 = vmatprep.subr.mxu0 0.0
    %275 = vmatpush1.msra.mxu0 0.0
    %276 = vmatprep.subr.mxu0 0.0
    %277 = vmatpush1.msra.mxu0 0.0
    %278 = vmatprep.subr.mxu0 0.0
    %279 = vmatpush1.msra.mxu0 0.0
    %280 = vmatprep.subr.mxu0 0.0
    %281 = vmatpush1.msra.mxu0 0.0
    %282 = vmatprep.subr.mxu0 0.0
    %283 = vmatpush1.msra.mxu0 0.0
    %284 = vmatprep.subr.mxu0 0.0
    %285 = vmatpush1.msra.mxu0 0.0
    %286 = vmatprep.mubr.f32.mxu0 0.0
    %287 = vmatmul.mubr.f32.gmra.mrb[0].mxu0 %v220
    %v288 = vpop.f32.mrb[0].mxu0
    %v289 = vadd.f32 %v217, %v288
    %v290 = vpop.f32.mrb[0].mxu0
    %291 = vdwg.mxu0
    %v292 = vmin.f32 %v289, 0.0
    %v293 = vmul.f32 %v292, 1.442695
    %v294 = vpow.pop %v293
    %v295 = vsub.f32 %v294, 1.0
    %v296 = vmul.f32 %v295, 1.6732632
    %vm297 = vcmp.gt.f32.partialorder %v289, 0.0
    %v298 = vsel %vm297, %v289, %v296
    %v299 = vmul.f32 %v298, 1.050701
    %v300 = vld [vmem:[#allocation2 + $0x70] sm:$0xff]
    %v301 = vld [vmem:[#allocation2 + $0x78] sm:$0xff]
    %v302 = vld [vmem:[#allocation2 + $0x80] sm:$0xff]
    %v303 = vld [vmem:[#allocation2 + $0x88] sm:$0xff]
    %v304 = vld [vmem:[#allocation2 + $0x90] sm:$0xff]
    %v305 = vld [vmem:[#allocation2 + $0x98] sm:$0xff]
    %v306 = vld [vmem:[#allocation2 + $0xa0] sm:$0xff]
    %v307 = vld [vmem:[#allocation2 + $0xa8] sm:$0xff]
    %v308 = vld [vmem:[#allocation2 + $0xb] sm:$0x1]
    %v309 = vlaneseq
    %v310 = vshrl.u32 %v309, 7
    %v311 = vsub.s32 0, %v310
    %v312 = vrot.slane %v308, %v311
    %v314 = vsel %vm218, %v299, 0
    %316 = vmatprep.subr.mxu0 0.0
    %317 = vmatpush1.msra.mxu0 %v300
    %318 = vmatprep.subr.mxu0 0.0
    %319 = vmatpush1.msra.mxu0 %v301
    %320 = vmatprep.subr.mxu0 0.0
    %321 = vmatpush1.msra.mxu0 %v302
    %322 = vmatprep.subr.mxu0 0.0
    %323 = vmatpush1.msra.mxu0 %v303
    %324 = vmatprep.subr.mxu0 0.0
    %325 = vmatpush1.msra.mxu0 %v304
    %326 = vmatprep.subr.mxu0 0.0
    %327 = vmatpush1.msra.mxu0 %v305
    %328 = vmatprep.subr.mxu0 0.0
    %329 = vmatpush1.msra.mxu0 %v306
    %330 = vmatprep.subr.mxu0 0.0
    %331 = vmatpush1.msra.mxu0 %v307
    %332 = vmatprep.subr.mxu0 0.0
    %333 = vmatpush1.msra.mxu0 0.0
    %334 = vmatprep.subr.mxu0 0.0
    %335 = vmatpush1.msra.mxu0 0.0
    %336 = vmatprep.subr.mxu0 0.0
    %337 = vmatpush1.msra.mxu0 0.0
    %338 = vmatprep.subr.mxu0 0.0
    %339 = vmatpush1.msra.mxu0 0.0
    %340 = vmatprep.subr.mxu0 0.0
    %341 = vmatpush1.msra.mxu0 0.0
    %342 = vmatprep.subr.mxu0 0.0
    %343 = vmatpush1.msra.mxu0 0.0
    %344 = vmatprep.subr.mxu0 0.0
    %345 = vmatpush1.msra.mxu0 0.0
    %346 = vmatprep.subr.mxu0 0.0
    %347 = vmatpush1.msra.mxu0 0.0
    %348 = vmatprep.subr.mxu0 0.0
    %349 = vmatpush1.msra.mxu0 0.0
    %350 = vmatprep.subr.mxu0 0.0
    %351 = vmatpush1.msra.mxu0 0.0
    %352 = vmatprep.subr.mxu0 0.0
    %353 = vmatpush1.msra.mxu0 0.0
    %354 = vmatprep.subr.mxu0 0.0
    %355 = vmatpush1.msra.mxu0 0.0
    %356 = vmatprep.subr.mxu0 0.0
    %357 = vmatpush1.msra.mxu0 0.0
    %358 = vmatprep.subr.mxu0 0.0
    %359 = vmatpush1.msra.mxu0 0.0
    %360 = vmatprep.subr.mxu0 0.0
    %361 = vmatpush1.msra.mxu0 0.0
    %362 = vmatprep.subr.mxu0 0.0
    %363 = vmatpush1.msra.mxu0 0.0
    %364 = vmatprep.subr.mxu0 0.0
    %365 = vmatpush1.msra.mxu0 0.0
    %366 = vmatprep.subr.mxu0 0.0
    %367 = vmatpush1.msra.mxu0 0.0
    %368 = vmatprep.subr.mxu0 0.0
    %369 = vmatpush1.msra.mxu0 0.0
    %370 = vmatprep.subr.mxu0 0.0
    %371 = vmatpush1.msra.mxu0 0.0
    %372 = vmatprep.subr.mxu0 0.0
    %373 = vmatpush1.msra.mxu0 0.0
    %374 = vmatprep.subr.mxu0 0.0
    %375 = vmatpush1.msra.mxu0 0.0
    %376 = vmatprep.subr.mxu0 0.0
    %377 = vmatpush1.msra.mxu0 0.0
    %378 = vmatprep.subr.mxu0 0.0
    %379 = vmatpush1.msra.mxu0 0.0
    %380 = vmatprep.mubr.f32.mxu0 0.0
    %381 = vmatmul.mubr.f32.gmra.mrb[0].mxu0 %v314
    %v382 = vpop.f32.mrb[0].mxu0
    %v383 = vadd.f32 %v312, %v382
    %v384 = vpop.f32.mrb[0].mxu0
    %385 = vdwg.mxu0
    %v386 = vmin.f32 %v383, 0.0
    %v387 = vmul.f32 %v386, 1.442695
    %v388 = vpow.pop %v387
    %v389 = vsub.f32 %v388, 1.0
    %v390 = vmul.f32 %v389, 1.6732632
    %vm391 = vcmp.gt.f32.partialorder %v383, 0.0
    %v392 = vsel %vm391, %v383, %v390
    %v393 = vmul.f32 %v392, 1.050701
    %v394 = vld [vmem:[#allocation2 + $0xb0] sm:$0xff]
    %v395 = vld [vmem:[#allocation2 + $0xb8] sm:$0xff]
    %v396 = vld [vmem:[#allocation2 + $0xc0] sm:$0xff]
    %v397 = vld [vmem:[#allocation2 + $0xc8] sm:$0xff]
    %v398 = vld [vmem:[#allocation2 + $0xd0] sm:$0xff]
    %v399 = vld [vmem:[#allocation2 + $0xd8] sm:$0xff]
    %v400 = vld [vmem:[#allocation2 + $0xe0] sm:$0xff]
    %v401 = vld [vmem:[#allocation2 + $0xe8] sm:$0xff]
    %v402 = vld [vmem:[#allocation2 + $0xc] sm:$0x1]
    %v403 = vlaneseq
    %v404 = vshrl.u32 %v403, 7
    %v405 = vsub.s32 0, %v404
    %v406 = vrot.slane %v402, %v405
    %v408 = vsel %vm218, %v393, 0
    %410 = vmatprep.subr.mxu0 0.0
    %411 = vmatpush1.msra.mxu0 %v394
    %412 = vmatprep.subr.mxu0 0.0
    %413 = vmatpush1.msra.mxu0 %v395
    %414 = vmatprep.subr.mxu0 0.0
    %415 = vmatpush1.msra.mxu0 %v396
    %416 = vmatprep.subr.mxu0 0.0
    %417 = vmatpush1.msra.mxu0 %v397
    %418 = vmatprep.subr.mxu0 0.0
    %419 = vmatpush1.msra.mxu0 %v398
    %420 = vmatprep.subr.mxu0 0.0
    %421 = vmatpush1.msra.mxu0 %v399
    %422 = vmatprep.subr.mxu0 0.0
    %423 = vmatpush1.msra.mxu0 %v400
    %424 = vmatprep.subr.mxu0 0.0
    %425 = vmatpush1.msra.mxu0 %v401
    %426 = vmatprep.subr.mxu0 0.0
    %427 = vmatpush1.msra.mxu0 0.0
    %428 = vmatprep.subr.mxu0 0.0
    %429 = vmatpush1.msra.mxu0 0.0
    %430 = vmatprep.subr.mxu0 0.0
    %431 = vmatpush1.msra.mxu0 0.0
    %432 = vmatprep.subr.mxu0 0.0
    %433 = vmatpush1.msra.mxu0 0.0
    %434 = vmatprep.subr.mxu0 0.0
    %435 = vmatpush1.msra.mxu0 0.0
    %436 = vmatprep.subr.mxu0 0.0
    %437 = vmatpush1.msra.mxu0 0.0
    %438 = vmatprep.subr.mxu0 0.0
    %439 = vmatpush1.msra.mxu0 0.0
    %440 = vmatprep.subr.mxu0 0.0
    %441 = vmatpush1.msra.mxu0 0.0
    %442 = vmatprep.subr.mxu0 0.0
    %443 = vmatpush1.msra.mxu0 0.0
    %444 = vmatprep.subr.mxu0 0.0
    %445 = vmatpush1.msra.mxu0 0.0
    %446 = vmatprep.subr.mxu0 0.0
    %447 = vmatpush1.msra.mxu0 0.0
    %448 = vmatprep.subr.mxu0 0.0
    %449 = vmatpush1.msra.mxu0 0.0
    %450 = vmatprep.subr.mxu0 0.0
    %451 = vmatpush1.msra.mxu0 0.0
    %452 = vmatprep.subr.mxu0 0.0
    %453 = vmatpush1.msra.mxu0 0.0
    %454 = vmatprep.subr.mxu0 0.0
    %455 = vmatpush1.msra.mxu0 0.0
    %456 = vmatprep.subr.mxu0 0.0
    %457 = vmatpush1.msra.mxu0 0.0
    %458 = vmatprep.subr.mxu0 0.0
    %459 = vmatpush1.msra.mxu0 0.0
    %460 = vmatprep.subr.mxu0 0.0
    %461 = vmatpush1.msra.mxu0 0.0
    %462 = vmatprep.subr.mxu0 0.0
    %463 = vmatpush1.msra.mxu0 0.0
    %464 = vmatprep.subr.mxu0 0.0
    %465 = vmatpush1.msra.mxu0 0.0
    %466 = vmatprep.subr.mxu0 0.0
    %467 = vmatpush1.msra.mxu0 0.0
    %468 = vmatprep.subr.mxu0 0.0
    %469 = vmatpush1.msra.mxu0 0.0
    %470 = vmatprep.subr.mxu0 0.0
    %471 = vmatpush1.msra.mxu0 0.0
    %472 = vmatprep.subr.mxu0 0.0
    %473 = vmatpush1.msra.mxu0 0.0
    %474 = vmatprep.mubr.f32.mxu0 0.0
    %475 = vmatmul.mubr.f32.gmra.mrb[0].mxu0 %v408
    %v476 = vpop.f32.mrb[0].mxu0
    %v477 = vadd.f32 %v406, %v476
    %v478 = vpop.f32.mrb[0].mxu0
    %479 = vdwg.mxu0
    %v480 = vmin.f32 %v477, 0.0
    %v481 = vmul.f32 %v480, 1.442695
    %v482 = vpow.pop %v481
    %v483 = vsub.f32 %v482, 1.0
    %v484 = vmul.f32 %v483, 1.6732632
    %vm485 = vcmp.gt.f32.partialorder %v477, 0.0
    %v486 = vsel %vm485, %v477, %v484
    %v487 = vmul.f32 %v486, 1.050701
    %v488 = vld [vmem:[#allocation2 + $0xf0] sm:$0xff]
    %v489 = vld [vmem:[#allocation2 + $0xf8] sm:$0xff]
    %v490 = vld [vmem:[#allocation2 + $0x100] sm:$0xff]
    %v491 = vld [vmem:[#allocation2 + $0x108] sm:$0xff]
    %v492 = vld [vmem:[#allocation2 + $0x110] sm:$0xff]
    %v493 = vld [vmem:[#allocation2 + $0x118] sm:$0xff]
    %v494 = vld [vmem:[#allocation2 + $0x120] sm:$0xff]
    %v495 = vld [vmem:[#allocation2 + $0x128] sm:$0xff]
    %v496 = vld [vmem:[#allocation2 + $0xd] sm:$0x1]
    %v497 = vlaneseq
    %v498 = vshrl.u32 %v497, 7
    %v499 = vsub.s32 0, %v498
    %v500 = vrot.slane %v496, %v499
    %v502 = vsel %vm218, %v487, 0
    %504 = vmatprep.subr.mxu0 0.0
    %505 = vmatpush1.msra.mxu0 %v488
    %506 = vmatprep.subr.mxu0 0.0
    %507 = vmatpush1.msra.mxu0 %v489
    %508 = vmatprep.subr.mxu0 0.0
    %509 = vmatpush1.msra.mxu0 %v490
    %510 = vmatprep.subr.mxu0 0.0
    %511 = vmatpush1.msra.mxu0 %v491
    %512 = vmatprep.subr.mxu0 0.0
    %513 = vmatpush1.msra.mxu0 %v492
    %514 = vmatprep.subr.mxu0 0.0
    %515 = vmatpush1.msra.mxu0 %v493
    %516 = vmatprep.subr.mxu0 0.0
    %517 = vmatpush1.msra.mxu0 %v494
    %518 = vmatprep.subr.mxu0 0.0
    %519 = vmatpush1.msra.mxu0 %v495
    %520 = vmatprep.subr.mxu0 0.0
    %521 = vmatpush1.msra.mxu0 0.0
    %522 = vmatprep.subr.mxu0 0.0
    %523 = vmatpush1.msra.mxu0 0.0
    %524 = vmatprep.subr.mxu0 0.0
    %525 = vmatpush1.msra.mxu0 0.0
    %526 = vmatprep.subr.mxu0 0.0
    %527 = vmatpush1.msra.mxu0 0.0
    %528 = vmatprep.subr.mxu0 0.0
    %529 = vmatpush1.msra.mxu0 0.0
    %530 = vmatprep.subr.mxu0 0.0
    %531 = vmatpush1.msra.mxu0 0.0
    %532 = vmatprep.subr.mxu0 0.0
    %533 = vmatpush1.msra.mxu0 0.0
    %534 = vmatprep.subr.mxu0 0.0
    %535 = vmatpush1.msra.mxu0 0.0
    %536 = vmatprep.subr.mxu0 0.0
    %537 = vmatpush1.msra.mxu0 0.0
    %538 = vmatprep.subr.mxu0 0.0
    %539 = vmatpush1.msra.mxu0 0.0
    %540 = vmatprep.subr.mxu0 0.0
    %541 = vmatpush1.msra.mxu0 0.0
    %542 = vmatprep.subr.mxu0 0.0
    %543 = vmatpush1.msra.mxu0 0.0
    %544 = vmatprep.subr.mxu0 0.0
    %545 = vmatpush1.msra.mxu0 0.0
    %546 = vmatprep.subr.mxu0 0.0
    %547 = vmatpush1.msra.mxu0 0.0
    %548 = vmatprep.subr.mxu0 0.0
    %549 = vmatpush1.msra.mxu0 0.0
    %550 = vmatprep.subr.mxu0 0.0
    %551 = vmatpush1.msra.mxu0 0.0
    %552 = vmatprep.subr.mxu0 0.0
    %553 = vmatpush1.msra.mxu0 0.0
    %554 = vmatprep.subr.mxu0 0.0
    %555 = vmatpush1.msra.mxu0 0.0
    %556 = vmatprep.subr.mxu0 0.0
    %557 = vmatpush1.msra.mxu0 0.0
    %558 = vmatprep.subr.mxu0 0.0
    %559 = vmatpush1.msra.mxu0 0.0
    %560 = vmatprep.subr.mxu0 0.0
    %561 = vmatpush1.msra.mxu0 0.0
    %562 = vmatprep.subr.mxu0 0.0
    %563 = vmatpush1.msra.mxu0 0.0
    %564 = vmatprep.subr.mxu0 0.0
    %565 = vmatpush1.msra.mxu0 0.0
    %566 = vmatprep.subr.mxu0 0.0
    %567 = vmatpush1.msra.mxu0 0.0
    %568 = vmatprep.mubr.f32.mxu0 0.0
    %569 = vmatmul.mubr.f32.gmra.mrb[0].mxu0 %v502
    %v570 = vpop.f32.mrb[0].mxu0
    %v571 = vadd.f32 %v500, %v570
    %v572 = vpop.f32.mrb[0].mxu0
    %573 = vdwg.mxu0
    %574 = vst [vmem:[%s2] sm:$0xff] %v571
    // Predicated region
    $region14: #{rma_act_inference.1} parent=1 // pred_check
      _
    $region15: #{rma_act_inference.1} parent=1 // pred_check_branch
      %576 = sbr.rel (0) target = $region17
    $region16: #{rma_act_inference.1} parent=1 // pred_region
      _
    $region17: #{rma_act_inference.1} parent=1 // pred_fallthru
      _
    // Predicated region
    $region18: #{rma_act_inference.1} parent=1 // pred_check
      _
    $region19: #{rma_act_inference.1} parent=1 // pred_check_branch
      %578 = sbr.rel (0) target = $region21
    $region20: #{rma_act_inference.1} parent=1 // pred_region
      _
    $region21: #{rma_act_inference.1} parent=1 // pred_fallthru
      _
    %579 = vsyncpa [#allocation3], 1

</llo_original>
